<compile_context>
chip_gen: v5e
topology: v5e:2x2
jax: 0.10.0
libtpu: 0.0.40
codegen_flags: <defaults>
</compile_context>

<pallas_src>
import functools

import jax
import jax.numpy as jnp
from jax.experimental import pallas as pl
from jax.experimental.pallas import tpu as pltpu


def _round_up(x, m):
    return (x + m - 1) // m * m


def _identifier_kernel(cls_ref, feat_ref, w_ref, b_ref, o_ref, *, n_visual):
    """One grid step == tb batch examples.

    cls_ref:  (tb, H_enc)   f32  CLS-token hidden states
    feat_ref: (tb, N, V)    f32  visual candidate features (native layout, no padding)
    w_ref:    (H_enc, V+1)  f32  folded text weights  [Wt^T @ Wv | Wt^T @ bv]
    b_ref:    (1, V+1)      f32  folded text bias     [bt  @ Wv  | bt . bv  ]
    o_ref:    (tb, N)       f32  per-candidate ambiguity logits
    """
    # Single MXU pass for the whole text path of tb examples.
    uc = jnp.dot(cls_ref[...], w_ref[...],
                 preferred_element_type=jnp.float32) + b_ref[...]        # (tb, V+1)
    u = uc[:, :n_visual]                                                 # (tb, V)
    c = uc[:, n_visual:]                                                 # (tb, 1)

    # logits[b, n] = feats[b, n, :] . u[b, :] + c[b]
    logits = jnp.sum(feat_ref[...] * u[:, None, :], axis=-1) + c         # (tb, N)
    o_ref[...] = logits.astype(o_ref.dtype)


def ambiguous_candidate_identifier(last_hidden_states, features,
                                   text_fc_w, text_fc_b,
                                   visual_fc_w, visual_fc_b,
                                   *, tb_max=256, vmem_budget_bytes=24 << 20):
    """Pallas wrapper.

    last_hidden_states: (B, S, H_enc) float32   encoder last hidden states
    features:           (B, N, V)     float32   visual candidate features
    text_fc_w:          (H, H_enc)    PyTorch nn.Linear weight (out, in)
    text_fc_b:          (H,)
    visual_fc_w:        (H, V)        PyTorch nn.Linear weight (out, in)
    visual_fc_b:        (H,)
    returns: (B, N) float32 logits (row b == the module's batch_logits[b]).
    """
    B, S, H_enc = last_hidden_states.shape
    _, N, V = features.shape

    # ---- fold the text path (once, f32) -------------------------------------
    wt = jnp.asarray(text_fc_w, jnp.float32)        # (H, H_enc)
    bt = jnp.asarray(text_fc_b, jnp.float32)        # (H,)
    wv = jnp.asarray(visual_fc_w, jnp.float32)      # (H, V)
    bv = jnp.asarray(visual_fc_b, jnp.float32)      # (H,)
    w_fold = jnp.concatenate([wt.T @ wv, (wt.T @ bv)[:, None]], axis=1)      # (H_enc, V+1)
    b_fold = jnp.concatenate([bt @ wv, (bt @ bv)[None]], axis=0)[None, :]    # (1, V+1)

    # CLS pooling in the wrapper: only sequence position 0 is ever read.
    cls = last_hidden_states[:, 0, :].astype(jnp.float32)                    # (B, H_enc)
    feats = jnp.asarray(features, jnp.float32)                               # (B, N, V)

    # ---- batch tile selection ------------------------------------------------
    def step_bytes(tb_):
        feat_blk = tb_ * N * V * 4
        # double-buffered feats + in-body f32 product + (cls, out) double buffers + weights
        return (2 * feat_blk + feat_blk
                + 2 * tb_ * H_enc * 4 + 2 * tb_ * N * 4
                + 2 * (H_enc + 1) * (V + 1) * 4)

    if B <= tb_max and step_bytes(B) <= vmem_budget_bytes:
        # Whole batch in one block: full-dim block shapes need no 8-alignment or padding.
        tb, B_pad = B, B
    else:
        tb = min(tb_max, _round_up(B, 8))
        while tb > 8 and step_bytes(tb) > vmem_budget_bytes:
            tb = max(8, _round_up(tb // 2, 8))
        B_pad = _round_up(B, tb)
        # v7x has 2 TensorCores: prefer >= 2 parallel grid steps when the batch allows.
        if B_pad // tb < 2 and B >= 16:
            tb = max(8, _round_up(-(-B // 2), 8))
            B_pad = _round_up(B, tb)

    if B_pad != B:
        cls = jnp.pad(cls, ((0, B_pad - B), (0, 0)))
        feats = jnp.pad(feats, ((0, B_pad - B), (0, 0), (0, 0)))

    kernel = functools.partial(_identifier_kernel, n_visual=V)

    out = pl.pallas_call(
        kernel,
        out_shape=jax.ShapeDtypeStruct((B_pad, N), jnp.float32),
        grid_spec=pltpu.PrefetchScalarGridSpec(
            num_scalar_prefetch=0,
            grid=(B_pad // tb,),
            in_specs=[
                pl.BlockSpec((tb, H_enc), lambda i: (i, 0)),       # CLS hidden states
                pl.BlockSpec((tb, N, V), lambda i: (i, 0, 0)),     # visual features (f32, unpadded N/V)
                pl.BlockSpec((H_enc, V + 1), lambda i: (0, 0)),    # folded text weights
                pl.BlockSpec((1, V + 1), lambda i: (0, 0)),        # folded text bias
            ],
            out_specs=pl.BlockSpec((tb, N), lambda i: (i, 0)),
        ),
        compiler_params=pltpu.CompilerParams(
            dimension_semantics=("parallel",),
            vmem_limit_bytes=32 << 20,        # explicit: safe on v5e/v6e/v7x, > v5e 16 MiB default
        ),
    )(cls, feats, w_fold, b_fold)

    return out[:B]                                                            # (B, N)


def _reference(last_hidden_states, features, text_fc_w, text_fc_b,
               visual_fc_w, visual_fc_b):
    text_embed = last_hidden_states[:, 0, :]                                  # (B, H_enc)
    text_embed = text_embed @ text_fc_w.T + text_fc_b                         # (B, H)
    out = []
    for vf, tf in zip(features, text_embed):
        vemb = vf @ visual_fc_w.T + visual_fc_b                               # (N, H)
        out.append(jnp.sum(vemb * tf, axis=-1))                               # (N,)
    return jnp.stack(out)                                                     # (B, N)


if __name__ == "__main__":
    # Small synthetic shapes consistent with the module's forward pass.
    B, S = 2, 8           # batch, sequence length
    H_ENC = 32            # text_encoder.config.hidden_size (synthetic)
    H = 32                # args['hidden_size']
    V = 16                # args['visual_feature_size']
    N = 8                 # number of visual candidates per example

    key = jax.random.PRNGKey(0)
    k1, k2, k3, k4, k5, k6 = jax.random.split(key, 6)

    last_hidden_states = jax.random.normal(k1, (B, S, H_ENC), jnp.float32)
    features = jax.random.normal(k2, (B, N, V), jnp.float32)

    # PyTorch nn.Linear weight layout: (out, in).
    text_fc_w = jax.random.normal(k3, (H, H_ENC), jnp.float32) * 0.05
    text_fc_b = jax.random.normal(k4, (H,), jnp.float32) * 0.05
    visual_fc_w = jax.random.normal(k5, (H, V), jnp.float32) * 0.05
    visual_fc_b = jax.random.normal(k6, (H,), jnp.float32) * 0.05

    logits = ambiguous_candidate_identifier(
        last_hidden_states, features, text_fc_w, text_fc_b,
        visual_fc_w, visual_fc_b)
    logits = jax.block_until_ready(logits)

    ref = _reference(last_hidden_states, features, text_fc_w,
                     text_fc_b, visual_fc_w, visual_fc_b)

    assert logits.shape == ref.shape, (logits.shape, ref.shape)
    # Full f32 path (folded weights computed in f32, f32 MXU accumulation).
    assert jnp.allclose(logits, ref, atol=1e-2, rtol=1e-2), (logits, ref)

    print("KERNEL_OK")
</pallas_src>

<mosaic_0001>
module attributes {stable_mosaic.version = 11 : i64} {
  func.func @_identifier_kernel(%arg0: i32, %arg1: memref<2x32xf32, #tpu.memory_space<vmem>>, %arg2: memref<2x8x16xf32, #tpu.memory_space<vmem>>, %arg3: memref<32x17xf32, #tpu.memory_space<vmem>>, %arg4: memref<1x17xf32, #tpu.memory_space<vmem>>, %arg5: memref<2x8xf32, #tpu.memory_space<vmem>>) attributes {dimension_semantics = [#tpu.dimension_semantics<parallel>], iteration_bounds = array<i64: 1>, scalar_prefetch = 0 : i64, scratch_operands = 0 : i64, tpu.core_type = #tpu.core_type<tc>, window_params = [{transform_indices = @transform_0, window_bounds = array<i64: 2, 32>}, {transform_indices = @transform_1, window_bounds = array<i64: 2, 8, 16>}, {pipeline_mode = #tpu.pipeline_mode<synchronous>, transform_indices = @transform_2, window_bounds = array<i64: 32, 17>}, {pipeline_mode = #tpu.pipeline_mode<synchronous>, transform_indices = @transform_3, window_bounds = array<i64: 1, 17>}, {transform_indices = @transform_4, window_bounds = array<i64: 2, 8>}]} {
    %c0 = arith.constant 0 : index
    %c0_0 = arith.constant 0 : index
    %0 = vector.load %arg1[%c0, %c0_0] : memref<2x32xf32, #tpu.memory_space<vmem>>, vector<2x32xf32>
    %c0_1 = arith.constant 0 : index
    %c0_2 = arith.constant 0 : index
    %1 = vector.load %arg3[%c0_1, %c0_2] : memref<32x17xf32, #tpu.memory_space<vmem>>, vector<32x17xf32>
    %cst = arith.constant dense<0.000000e+00> : vector<2x17xf32>
    %2 = tpu.matmul %0, %1, %cst {dimension_numbers = #tpu.dot_dimension_numbers<[1], [0], [0], [1], [0, 0, 1, 1], [], []>} : vector<2x32xf32>, vector<32x17xf32>, vector<2x17xf32> -> vector<2x17xf32>
    %c0_3 = arith.constant 0 : index
    %c0_4 = arith.constant 0 : index
    %3 = vector.load %arg4[%c0_3, %c0_4] : memref<1x17xf32, #tpu.memory_space<vmem>>, vector<1x17xf32>
    %4 = vector.broadcast %3 : vector<1x17xf32> to vector<2x17xf32>
    %5 = arith.addf %2, %4 : vector<2x17xf32>
    %6 = vector.extract_strided_slice %5 {offsets = [0, 0], sizes = [2, 16], strides = [1, 1]} : vector<2x17xf32> to vector<2x16xf32>
    %7 = vector.extract_strided_slice %5 {offsets = [0, 16], sizes = [2, 1], strides = [1, 1]} : vector<2x17xf32> to vector<2x1xf32>
    %c0_5 = arith.constant 0 : index
    %c0_6 = arith.constant 0 : index
    %c0_7 = arith.constant 0 : index
    %8 = vector.load %arg2[%c0_5, %c0_6, %c0_7] : memref<2x8x16xf32, #tpu.memory_space<vmem>>, vector<2x8x16xf32>
    %9 = vector.shape_cast %6 : vector<2x16xf32> to vector<2x1x16xf32>
    %10 = vector.broadcast %9 : vector<2x1x16xf32> to vector<2x8x16xf32>
    %11 = arith.mulf %8, %10 : vector<2x8x16xf32>
    %cst_8 = arith.constant dense<0.000000e+00> : vector<2x8xf32>
    %12 = vector.multi_reduction <add>, %11, %cst_8 [2] : vector<2x8x16xf32> to vector<2x8xf32>
    %13 = vector.broadcast %7 : vector<2x1xf32> to vector<2x8xf32>
    %14 = arith.addf %12, %13 : vector<2x8xf32>
    %c0_9 = arith.constant 0 : index
    %c0_10 = arith.constant 0 : index
    %15 = vector.load %arg5[%c0_9, %c0_10] : memref<2x8xf32, #tpu.memory_space<vmem>>, vector<2x8xf32>
    tpu.vector_store %arg5[%c0_9, %c0_10], %14 {strides = array<i32>} : memref<2x8xf32, #tpu.memory_space<vmem>>, vector<2x8xf32>,
    return
  }
  func.func @transform_0(%arg0: i32) -> (i32, i32) {
    %c0_i32 = arith.constant 0 : i32
    %c0_i32_0 = arith.constant 0 : i32
    return %arg0, %c0_i32 : i32, i32
  }
  func.func @transform_1(%arg0: i32) -> (i32, i32, i32) {
    %c0_i32 = arith.constant 0 : i32
    %c0_i32_0 = arith.constant 0 : i32
    %c0_i32_1 = arith.constant 0 : i32
    return %arg0, %c0_i32, %c0_i32_0 : i32, i32, i32
  }
  func.func @transform_2(%arg0: i32) -> (i32, i32) {
    %c0_i32 = arith.constant 0 : i32
    %c0_i32_0 = arith.constant 0 : i32
    %c0_i32_1 = arith.constant 0 : i32
    return %c0_i32, %c0_i32_0 : i32, i32
  }
  func.func @transform_3(%arg0: i32) -> (i32, i32) {
    %c0_i32 = arith.constant 0 : i32
    %c0_i32_0 = arith.constant 0 : i32
    %c0_i32_1 = arith.constant 0 : i32
    return %c0_i32, %c0_i32_0 : i32, i32
  }
  func.func @transform_4(%arg0: i32) -> (i32, i32) {
    %c0_i32 = arith.constant 0 : i32
    %c0_i32_0 = arith.constant 0 : i32
    return %arg0, %c0_i32 : i32, i32
  }
}

</mosaic_0001>

<llo_original>
// kernel: tpu_custom_call.1
$region0: #{tpu_custom_call.1}
  #allocation0 [shape = 'u32[]', space=smem, size = 0x4, offset = 0x4, fixed_abs, tag = 'smem constant byte address 0x4 - core index']
  #allocation1 [shape = 'u32[72,128]{1,0:T(1,128)}', space=vmem, size = 0x9000, scoped, tag = 'internal scratch']
  %s0 = inlined_call_operand.vmem [shape: f32[2,32], index: 0, kind: input, shape index: {}]
  %s1 = inlined_call_operand.vmem [shape: f32[2,8,16], index: 1, kind: input, shape index: {}]
  %s2 = inlined_call_operand.vmem [shape: f32[32,17], index: 2, kind: input, shape index: {}]
  %s3 = inlined_call_operand.vmem [shape: f32[1,17], index: 3, kind: input, shape index: {}]
  %s4 = inlined_call_operand.hbm [shape: f32[2,8], index: 4, kind: output, shape index: {}]
  %s5 = sld [smem:[#allocation0]]
  $region26: #{tpu_custom_call.1} parent=0
    _
  %s7 = ssub.s32 1, %s5
  %s8 = scalar_select 0, %s7, %s5
  $region1: #{tpu_custom_call.1} parent=0
    #allocation2 [shape = 'u8[1024]{0}', space=vmem, size = 0x400, scoped, tag = 'output window, operand 0, single buffered']
    #allocation3 [shape = 's32[1]{0}', space=sflag, size = 0x4, scoped, tag = 'scoped memory for tpu_custom_call.1']
    %9 = vsyncpa [#allocation3], 0
    // Predicated region
    $region2: #{tpu_custom_call.1} parent=1 // pred_check
      _
    $region3: #{tpu_custom_call.1} parent=1 // pred_check_branch
      %11 = sbr.rel (0) target = $region5
    $region4: #{tpu_custom_call.1} parent=1 // pred_region
      _
    $region5: #{tpu_custom_call.1} parent=1 // pred_fallthru
      _
    // Predicated region
    $region6: #{tpu_custom_call.1} parent=1 // pred_check
      _
    $region7: #{tpu_custom_call.1} parent=1 // pred_check_branch
      %13 = sbr.rel (0) target = $region9
    $region8: #{tpu_custom_call.1} parent=1 // pred_region
      _
    $region9: #{tpu_custom_call.1} parent=1 // pred_fallthru
      _
    // Predicated region
    $region10: #{tpu_custom_call.1} parent=1 // pred_check
      _
    $region11: #{tpu_custom_call.1} parent=1 // pred_check_branch
      %15 = sbr.rel (0) target = $region13
    $region12: #{tpu_custom_call.1} parent=1 // pred_region
      _
    $region13: #{tpu_custom_call.1} parent=1 // pred_fallthru
      _
    // Predicated region
    $region14: #{tpu_custom_call.1} parent=1 // pred_check
      _
    $region15: #{tpu_custom_call.1} parent=1 // pred_check_branch
      %17 = sbr.rel (0) target = $region17
    $region16: #{tpu_custom_call.1} parent=1 // pred_region
      _
    $region17: #{tpu_custom_call.1} parent=1 // pred_fallthru
      _
    %v18 = vld [vmem:[%s0] sm:$0x3]
    %v19 = vld [vmem:[%s2] sm:$0xff]
    %v20 = vld [vmem:[%s2 + $0x8] sm:$0xff]
    %v21 = vld [vmem:[%s2 + $0x10] sm:$0xff]
    %v22 = vld [vmem:[%s2 + $0x18] sm:$0xff]
    %v23 = vld [vmem:[%s3] sm:$0x1]
    %v25 = vperm.slane %v23, 0
    %vm27 = vcmask 261120
    %v29 = vsel %vm27, %v18, 0
    %31 = vmatpush.msra.mxu0 0.0
    %32 = vmatpush.msra.mxu0 0.0
    %33 = vmatpush.msra.mxu0 0.0
    %34 = vmatpush.msra.mxu0 0.0
    %35 = vmatpush.msra.mxu0 0.0
    %36 = vmatpush.msra.mxu0 0.0
    %37 = vmatpush.msra.mxu0 0.0
    %38 = vmatpush.msra.mxu0 0.0
    %39 = vmatpush.msra.mxu0 0.0
    %40 = vmatpush.msra.mxu0 0.0
    %41 = vmatpush.msra.mxu0 0.0
    %42 = vmatpush.msra.mxu0 0.0
    %43 = vmatpush.msra.mxu0 %v22
    %44 = vmatpush.msra.mxu0 %v21
    %45 = vmatpush.msra.mxu0 %v20
    %46 = vmatpush.msra.mxu0 %v19
    %47 = vmatmul.f32.gmra.mxu0 %v29
    %v48 = vpop.f32.mrf.mxu0
    %v49 = vadd.f32 %v25, %v48
    %50 = vdwg.mxu0
    %v51 = vld [vmem:[%s1] sm:$0xff]
    %v52 = vld [vmem:[%s1 + $0x8] sm:$0xff]
    %v54 = vrot.slane %v49, 1
    %v55 = vperm.slane %v49, 0
    %v56 = vperm.slane %v54, 0
    %v59 = vmul.f32 %v51, %v55
    %v60 = vmul.f32 %v52, %v56
    %vm61 = vcmask 130048
    %v62 = vsel %vm61, %v59, 0.0
    %63 = vadd.xlane.f32.xlu0 %v62
    %v64 = vpop.xlane.xlu0 %63
    %v65 = vsel %vm61, %v60, 0.0
    %66 = vadd.xlane.f32.xlu0 %v65
    %v67 = vpop.xlane.xlu0 %66
    %68 = vset.pattern.permute.xlu0 16
    %69 = vperm.xlu0 %68, %v49
    %v70 = vpop.permute.xlu0 %69
    %v71 = vperm.slane %v70, 0
    %v72 = vperm.slane %v70, 1
    %v75 = vadd.f32 %v64, %v71
    %v76 = vadd.f32 %v67, %v72
    %79 = vset.pattern.permute.xlu0 0
    %80 = vperm.xlu0 %79, %v75
    %v81 = vpop.permute.xlu0 %80
    %82 = vset.pattern.permute.xlu0 0
    %83 = vperm.xlu0 %82, %v76
    %v84 = vpop.permute.xlu0 %83
    %v85 = vlaneseq
    %v86 = vand.u32 %v85, 127
    %v87 = vperm.slane %v81, %v86
    %v88 = vperm.slane %v84, %v86
    %vm89 = vcmask 1041409
    %v90 = vsel %vm89, %v88, %v87
    %vm92 = vcmask 58368
    %93 = vst.msk [vmem:[#allocation2] sm:$0x3] %vm92, %v90
    // Predicated region
    $region18: #{tpu_custom_call.1} parent=1 // pred_check
      _
    $region19: #{tpu_custom_call.1} parent=1 // pred_check_branch
      %95 = sbr.rel (0) target = $region21
    $region20: #{tpu_custom_call.1} parent=1 // pred_region
      %97 = vsyncadd [#allocation3], 0
      %s99 = sshll.u32 [#allocation2], 4
      %s100 = int_to_ptr.vmem [resolvable:$true] %s99
      %s101 = sshll.u32 %s4, 4
      %s102 = int_to_ptr.hbm [resolvable:$true] %s101
      %104 = dma.vmem_to_hbm [thread:$0]  %s100, 32, %s102, [#allocation3]
    $region21: #{tpu_custom_call.1} parent=1 // pred_fallthru
      _
    // Predicated region
    $region22: #{tpu_custom_call.1} parent=1 // pred_check
      _
    $region23: #{tpu_custom_call.1} parent=1 // pred_check_branch
      %106 = sbr.rel (0) target = $region25
    $region24: #{tpu_custom_call.1} parent=1 // pred_region
      %108 = dma.done [#allocation3], 32
    $region25: #{tpu_custom_call.1} parent=1 // pred_fallthru
      _
    %109 = vsyncpa [#allocation3], 1

</llo_original>
